<compile_context>
chip_gen: v6e
topology: v6e:2x2x1
jax: 0.10.0
libtpu: 0.0.40
codegen_flags: <defaults>
</compile_context>

<pallas_src>
import functools
import math

import jax
import jax.numpy as jnp
import numpy as np
from jax.experimental import pallas as pl
from jax.experimental.pallas import tpu as pltpu  # noqa: F401  (TPU backend)

_LN_EPS = 1e-5   # torch.nn.LayerNorm default
_LANE = 128
_SUBLANE = 8


def _round_up(n, m):
    return ((n + m - 1) // m) * m


def compute_layer_widths(output_neurons, network_depth, minimum_width):
    widths = np.linspace(output_neurons, minimum_width, network_depth)
    return [int(w) for w in widths]


# ----------------------------------------------------------------------------
# Fused kernel: entire SynapseUNet forward in one kernel body.
# ----------------------------------------------------------------------------
def _fused_unet_kernel(x_ref, w_ref, b_ref, g_ref, be_ref, sg_ref, sbe_ref,
                       o_ref, *, widths):
    depth = len(widths)
    act = x_ref[...]                                           # (B_pad, D_pad)
    lane = jax.lax.broadcasted_iota(jnp.int32, act.shape, dimension=1)

    def masked_layer_norm(y, d_logical, gamma, beta):
        # LayerNorm over the first `d_logical` lanes only (rest is padding).
        mask = lane < d_logical
        inv_d = 1.0 / float(d_logical)
        ym = jnp.where(mask, y, 0.0)
        mean = jnp.sum(ym, axis=-1, keepdims=True) * inv_d
        diff = jnp.where(mask, y - mean, 0.0)
        var = jnp.sum(diff * diff, axis=-1, keepdims=True) * inv_d
        yn = (y - mean) * jax.lax.rsqrt(var + _LN_EPS)
        # gamma/beta are zero-padded -> padded lanes come out exactly 0.
        return jnp.where(mask, yn * gamma + beta, 0.0)

    def linear_ln_silu(x, li, d_out):
        # Dropout(p=0.0) is the identity (eval semantics).
        y = jnp.dot(x, w_ref[li], preferred_element_type=jnp.float32)
        y = y + b_ref[li]                                      # (1, D_pad) bcast
        yn = masked_layer_norm(y, d_out, g_ref[li], be_ref[li])
        return yn * jax.nn.sigmoid(yn)                         # SiLU; silu(0)=0

    # Static Python loop over the compile-time layer plan (fully unrolled).
    li = 0
    act = linear_ln_silu(act, li, widths[0]); li += 1          # initial proj
    skips = [act]
    for i in range(depth - 1):                                 # encode down
        act = linear_ln_silu(act, li, widths[i + 1]); li += 1
        skips.append(act)

    cur = skips[-1]
    for k in range(depth - 1):                                 # decode up
        up_idx = depth - 2 - k
        cur = linear_ln_silu(cur, li, widths[up_idx]); li += 1
        y = cur + skips[up_idx]
        cur = masked_layer_norm(y, widths[up_idx],
                                sg_ref[up_idx], sbe_ref[up_idx])

    o_ref[...] = cur


# ----------------------------------------------------------------------------
# Parameter init (matches torch defaults) and one-time packing/padding.
# ----------------------------------------------------------------------------
def init_linear_ln(key, d_in, d_out):
    kw, kb = jax.random.split(key)
    bound = 1.0 / math.sqrt(d_in)
    w = jax.random.uniform(kw, (d_in, d_out), jnp.float32, -bound, bound)
    b = jax.random.uniform(kb, (d_out,), jnp.float32, -bound, bound)
    gamma = jnp.ones((d_out,), jnp.float32)
    beta = jnp.zeros((d_out,), jnp.float32)
    return {"w": w, "b": b, "gamma": gamma, "beta": beta}


def init_params(key, input_dim, output_neurons, network_depth, minimum_width):
    widths = compute_layer_widths(output_neurons, network_depth, minimum_width)
    keys = jax.random.split(key, 1 + 2 * (len(widths) - 1))
    params = {"widths": widths,
              "initial": init_linear_ln(keys[0], input_dim, widths[0]),
              "down": [], "up": [], "skip_ln": []}
    kidx = 1
    for i in range(len(widths) - 1):
        params["down"].append(init_linear_ln(keys[kidx], widths[i], widths[i + 1]))
        kidx += 1
        params["up"].append(init_linear_ln(keys[kidx], widths[i + 1], widths[i]))
        kidx += 1
        params["skip_ln"].append(
            {"gamma": jnp.ones((widths[i],), jnp.float32),
             "beta": jnp.zeros((widths[i],), jnp.float32)})
    return params


def pack_params(params, input_dim, d_pad=None):
    """Zero-pad all params to d_pad lanes and stack them in execution order."""
    widths = params["widths"]
    depth = len(widths)
    assert depth >= 2, "SynapseUNet needs network_depth >= 2"
    if d_pad is None:
        d_pad = _round_up(max([input_dim] + widths), _LANE)

    def pad_block(blk):
        di, do = blk["w"].shape
        w = jnp.zeros((d_pad, d_pad), jnp.float32).at[:di, :do].set(blk["w"])
        b = jnp.zeros((1, d_pad), jnp.float32).at[0, :do].set(blk["b"])
        g = jnp.zeros((1, d_pad), jnp.float32).at[0, :do].set(blk["gamma"])
        be = jnp.zeros((1, d_pad), jnp.float32).at[0, :do].set(blk["beta"])
        return w, b, g, be

    # Execution order: initial, down[0..depth-2], up[depth-2], ..., up[0]
    blocks = ([params["initial"]] + list(params["down"]) +
              [params["up"][depth - 2 - k] for k in range(depth - 1)])
    ws, bs, gs, bes = zip(*(pad_block(b) for b in blocks))

    skip_gs, skip_bes = [], []
    for i in range(depth - 1):
        d = widths[i]
        skip_gs.append(jnp.zeros((1, d_pad), jnp.float32)
                       .at[0, :d].set(params["skip_ln"][i]["gamma"]))
        skip_bes.append(jnp.zeros((1, d_pad), jnp.float32)
                        .at[0, :d].set(params["skip_ln"][i]["beta"]))

    return {
        "widths": widths,
        "d_pad": d_pad,
        "w": jnp.stack(ws),            # (n_lin, d_pad, d_pad)
        "b": jnp.stack(bs),            # (n_lin, 1, d_pad)
        "g": jnp.stack(gs),            # (n_lin, 1, d_pad)
        "be": jnp.stack(bes),          # (n_lin, 1, d_pad)
        "skip_g": jnp.stack(skip_gs),  # (depth-1, 1, d_pad)
        "skip_be": jnp.stack(skip_bes),
    }


# ----------------------------------------------------------------------------
# Forward wrapper: single pallas_call, whole network resident in VMEM.
# ----------------------------------------------------------------------------
def _full_spec(shape):
    return pl.BlockSpec(shape, lambda: (0,) * len(shape))


def synapse_unet_forward(packed, x):
    widths = packed["widths"]
    d_pad = packed["d_pad"]
    depth = len(widths)
    B, d_in = x.shape
    B_pad = max(_SUBLANE, _round_up(B, _SUBLANE))

    # Zero-pad the input once (padded lanes stay 0 through the network).
    x_pad = jnp.zeros((B_pad, d_pad), jnp.float32).at[:B, :d_in].set(
        x.astype(jnp.float32))

    operands = (x_pad, packed["w"], packed["b"], packed["g"], packed["be"],
                packed["skip_g"], packed["skip_be"])

    n_lin = 2 * depth - 1
    flops = 2 * B_pad * d_pad * d_pad * n_lin           # padded MXU work
    transcendentals = 2 * B_pad * d_pad * n_lin         # sigmoid + rsqrt
    bytes_accessed = (sum(int(np.prod(a.shape)) * 4 for a in operands)
                      + B_pad * d_pad * 4)

    kernel = functools.partial(_fused_unet_kernel, widths=widths)

    out = pl.pallas_call(
        kernel,
        out_shape=jax.ShapeDtypeStruct((B_pad, d_pad), jnp.float32),
        in_specs=[_full_spec(a.shape) for a in operands],
        out_specs=_full_spec((B_pad, d_pad)),
        cost_estimate=pl.CostEstimate(
            flops=flops,
            transcendentals=transcendentals,
            bytes_accessed=bytes_accessed),
    )(*operands)

    # Final logical output has width widths[0] (== output_neurons).
    return out[:B, :widths[0]]
    # TODO(synk): if batch (or CTM tick count) becomes large, add a grid over
    # the batch axis with dimension_semantics=("parallel",) to use both
    # TensorCores on v7x; unnecessary at B=8.


# ----------------------------------------------------------------------------
# Pure-JAX reference (unpadded) for a sanity check.
# ----------------------------------------------------------------------------
def _ref_linear_ln_silu(x, p):
    y = x @ p["w"] + p["b"]
    mean = jnp.mean(y, axis=-1, keepdims=True)
    var = jnp.mean((y - mean) ** 2, axis=-1, keepdims=True)
    yn = (y - mean) / jnp.sqrt(var + _LN_EPS) * p["gamma"] + p["beta"]
    return yn * jax.nn.sigmoid(yn)


def _ref_add_ln(a, s, ln):
    y = a + s
    mean = jnp.mean(y, axis=-1, keepdims=True)
    var = jnp.mean((y - mean) ** 2, axis=-1, keepdims=True)
    return (y - mean) / jnp.sqrt(var + _LN_EPS) * ln["gamma"] + ln["beta"]


def synapse_unet_reference(params, x):
    act = _ref_linear_ln_silu(x, params["initial"])
    skips = [act]
    for blk in params["down"]:
        act = _ref_linear_ln_silu(act, blk)
        skips.append(act)
    cur = skips[-1]
    num_up = len(params["up"])
    for k in range(num_up):
        up_idx = num_up - 1 - k
        cur = _ref_linear_ln_silu(cur, params["up"][up_idx])
        cur = _ref_add_ln(cur, skips[up_idx], params["skip_ln"][up_idx])
    return cur


# ----------------------------------------------------------------------------
if __name__ == "__main__":
    # Small configuration: output_neurons=32, depth=3, min_width=16
    #   -> layer widths [32, 24, 16]; concatenated input dim = 48; batch = 8.
    key = jax.random.PRNGKey(0)
    k_param, k_x = jax.random.split(key)

    B, D_IN = 8, 48
    OUTPUT_NEURONS, DEPTH, MIN_WIDTH = 32, 3, 16

    params = init_params(k_param, D_IN, OUTPUT_NEURONS, DEPTH, MIN_WIDTH)
    packed = pack_params(params, D_IN)
    x = jax.random.normal(k_x, (B, D_IN), jnp.float32)

    fwd = jax.jit(functools.partial(synapse_unet_forward, packed))
    out = jax.block_until_ready(fwd(x))

    ref = jax.block_until_ready(synapse_unet_reference(params, x))
    assert out.shape == (B, OUTPUT_NEURONS), out.shape
    np.testing.assert_allclose(np.asarray(out), np.asarray(ref),
                               rtol=1e-2, atol=1e-2)

    print("KERNEL_OK")
</pallas_src>

<mosaic_0001>
module attributes {stable_mosaic.version = 11 : i64} {
  func.func @_fused_unet_kernel(%arg0: memref<8x128xf32, #tpu.memory_space<vmem>>, %arg1: memref<5x128x128xf32, #tpu.memory_space<vmem>>, %arg2: memref<5x1x128xf32, #tpu.memory_space<vmem>>, %arg3: memref<5x1x128xf32, #tpu.memory_space<vmem>>, %arg4: memref<5x1x128xf32, #tpu.memory_space<vmem>>, %arg5: memref<2x1x128xf32, #tpu.memory_space<vmem>>, %arg6: memref<2x1x128xf32, #tpu.memory_space<vmem>>, %arg7: memref<8x128xf32, #tpu.memory_space<vmem>>) attributes {dimension_semantics = [], scalar_prefetch = 0 : i64, scratch_operands = 0 : i64, tpu.core_type = #tpu.core_type<tc>} {
    %c0 = arith.constant 0 : index
    %c0_0 = arith.constant 0 : index
    %0 = vector.load %arg0[%c0, %c0_0] : memref<8x128xf32, #tpu.memory_space<vmem>>, vector<8x128xf32>
    %1 = tpu.iota {dimensions = array<i32: 1>} : vector<8x128xi32>
    %c0_1 = arith.constant 0 : index
    %c0_2 = arith.constant 0 : index
    %c0_3 = arith.constant 0 : index
    %2 = vector.load %arg1[%c0_1, %c0_2, %c0_3] : memref<5x128x128xf32, #tpu.memory_space<vmem>>, vector<1x128x128xf32>
    %3 = vector.shape_cast %2 : vector<1x128x128xf32> to vector<128x128xf32>
    %cst = arith.constant dense<0.000000e+00> : vector<8x128xf32>
    %4 = tpu.matmul %0, %3, %cst {dimension_numbers = #tpu.dot_dimension_numbers<[1], [0], [0], [1], [0, 0, 1, 1], [], []>} : vector<8x128xf32>, vector<128x128xf32>, vector<8x128xf32> -> vector<8x128xf32>
    %c0_4 = arith.constant 0 : index
    %c0_5 = arith.constant 0 : index
    %c0_6 = arith.constant 0 : index
    %5 = vector.load %arg2[%c0_4, %c0_5, %c0_6] : memref<5x1x128xf32, #tpu.memory_space<vmem>>, vector<1x1x128xf32>
    %6 = vector.shape_cast %5 : vector<1x1x128xf32> to vector<1x128xf32>
    %7 = vector.broadcast %6 : vector<1x128xf32> to vector<8x128xf32>
    %8 = arith.addf %4, %7 : vector<8x128xf32>
    %c0_7 = arith.constant 0 : index
    %c0_8 = arith.constant 0 : index
    %c0_9 = arith.constant 0 : index
    %9 = vector.load %arg3[%c0_7, %c0_8, %c0_9] : memref<5x1x128xf32, #tpu.memory_space<vmem>>, vector<1x1x128xf32>
    %10 = vector.shape_cast %9 : vector<1x1x128xf32> to vector<1x128xf32>
    %c0_10 = arith.constant 0 : index
    %c0_11 = arith.constant 0 : index
    %c0_12 = arith.constant 0 : index
    %11 = vector.load %arg4[%c0_10, %c0_11, %c0_12] : memref<5x1x128xf32, #tpu.memory_space<vmem>>, vector<1x1x128xf32>
    %12 = vector.shape_cast %11 : vector<1x1x128xf32> to vector<1x128xf32>
    %c32_i32 = arith.constant 32 : i32
    %13 = vector.broadcast %c32_i32 : i32 to vector<8x128xi32>
    %14 = arith.cmpi slt, %1, %13 : vector<8x128xi32>
    %cst_13 = arith.constant 0.000000e+00 : f32
    %15 = vector.broadcast %cst_13 : f32 to vector<8x128xf32>
    %16 = arith.select %14, %8, %15 : vector<8x128xi1>, vector<8x128xf32>
    %cst_14 = arith.constant dense<0.000000e+00> : vector<8xf32>
    %17 = vector.multi_reduction <add>, %16, %cst_14 [1] : vector<8x128xf32> to vector<8xf32>
    %18 = vector.shape_cast %17 : vector<8xf32> to vector<8x1xf32>
    %cst_15 = arith.constant 3.125000e-02 : f32
    %19 = vector.broadcast %cst_15 : f32 to vector<8x1xf32>
    %20 = arith.mulf %18, %19 : vector<8x1xf32>
    %21 = vector.broadcast %20 : vector<8x1xf32> to vector<8x128xf32>
    %22 = arith.subf %8, %21 : vector<8x128xf32>
    %cst_16 = arith.constant 0.000000e+00 : f32
    %23 = vector.broadcast %cst_16 : f32 to vector<8x128xf32>
    %24 = arith.select %14, %22, %23 : vector<8x128xi1>, vector<8x128xf32>
    %25 = arith.mulf %24, %24 : vector<8x128xf32>
    %cst_17 = arith.constant dense<0.000000e+00> : vector<8xf32>
    %26 = vector.multi_reduction <add>, %25, %cst_17 [1] : vector<8x128xf32> to vector<8xf32>
    %27 = vector.shape_cast %26 : vector<8xf32> to vector<8x1xf32>
    %cst_18 = arith.constant 3.125000e-02 : f32
    %28 = vector.broadcast %cst_18 : f32 to vector<8x1xf32>
    %29 = arith.mulf %27, %28 : vector<8x1xf32>
    %30 = vector.broadcast %20 : vector<8x1xf32> to vector<8x128xf32>
    %31 = arith.subf %8, %30 : vector<8x128xf32>
    %cst_19 = arith.constant 9.99999974E-6 : f32
    %32 = vector.broadcast %cst_19 : f32 to vector<8x1xf32>
    %33 = arith.addf %29, %32 : vector<8x1xf32>
    %34 = math.rsqrt %33 : vector<8x1xf32>
    %35 = vector.broadcast %34 : vector<8x1xf32> to vector<8x128xf32>
    %36 = arith.mulf %31, %35 : vector<8x128xf32>
    %37 = vector.broadcast %10 : vector<1x128xf32> to vector<8x128xf32>
    %38 = arith.mulf %36, %37 : vector<8x128xf32>
    %39 = vector.broadcast %12 : vector<1x128xf32> to vector<8x128xf32>
    %40 = arith.addf %38, %39 : vector<8x128xf32>
    %cst_20 = arith.constant 0.000000e+00 : f32
    %41 = vector.broadcast %cst_20 : f32 to vector<8x128xf32>
    %42 = arith.select %14, %40, %41 : vector<8x128xi1>, vector<8x128xf32>
    %43 = arith.negf %42 : vector<8x128xf32>
    %44 = math.exp %43 : vector<8x128xf32>
    %cst_21 = arith.constant 1.000000e+00 : f32
    %45 = vector.broadcast %cst_21 : f32 to vector<8x128xf32>
    %46 = arith.addf %45, %44 : vector<8x128xf32>
    %47 = arith.divf %45, %46 : vector<8x128xf32>
    %48 = arith.mulf %42, %47 : vector<8x128xf32>
    %c1 = arith.constant 1 : index
    %c0_22 = arith.constant 0 : index
    %c0_23 = arith.constant 0 : index
    %49 = vector.load %arg1[%c1, %c0_22, %c0_23] : memref<5x128x128xf32, #tpu.memory_space<vmem>>, vector<1x128x128xf32>
    %50 = vector.shape_cast %49 : vector<1x128x128xf32> to vector<128x128xf32>
    %cst_24 = arith.constant dense<0.000000e+00> : vector<8x128xf32>
    %51 = tpu.matmul %48, %50, %cst_24 {dimension_numbers = #tpu.dot_dimension_numbers<[1], [0], [0], [1], [0, 0, 1, 1], [], []>} : vector<8x128xf32>, vector<128x128xf32>, vector<8x128xf32> -> vector<8x128xf32>
    %c1_25 = arith.constant 1 : index
    %c0_26 = arith.constant 0 : index
    %c0_27 = arith.constant 0 : index
    %52 = vector.load %arg2[%c1_25, %c0_26, %c0_27] : memref<5x1x128xf32, #tpu.memory_space<vmem>>, vector<1x1x128xf32>
    %53 = vector.shape_cast %52 : vector<1x1x128xf32> to vector<1x128xf32>
    %54 = vector.broadcast %53 : vector<1x128xf32> to vector<8x128xf32>
    %55 = arith.addf %51, %54 : vector<8x128xf32>
    %c1_28 = arith.constant 1 : index
    %c0_29 = arith.constant 0 : index
    %c0_30 = arith.constant 0 : index
    %56 = vector.load %arg3[%c1_28, %c0_29, %c0_30] : memref<5x1x128xf32, #tpu.memory_space<vmem>>, vector<1x1x128xf32>
    %57 = vector.shape_cast %56 : vector<1x1x128xf32> to vector<1x128xf32>
    %c1_31 = arith.constant 1 : index
    %c0_32 = arith.constant 0 : index
    %c0_33 = arith.constant 0 : index
    %58 = vector.load %arg4[%c1_31, %c0_32, %c0_33] : memref<5x1x128xf32, #tpu.memory_space<vmem>>, vector<1x1x128xf32>
    %59 = vector.shape_cast %58 : vector<1x1x128xf32> to vector<1x128xf32>
    %c24_i32 = arith.constant 24 : i32
    %60 = vector.broadcast %c24_i32 : i32 to vector<8x128xi32>
    %61 = arith.cmpi slt, %1, %60 : vector<8x128xi32>
    %cst_34 = arith.constant 0.000000e+00 : f32
    %62 = vector.broadcast %cst_34 : f32 to vector<8x128xf32>
    %63 = arith.select %61, %55, %62 : vector<8x128xi1>, vector<8x128xf32>
    %cst_35 = arith.constant dense<0.000000e+00> : vector<8xf32>
    %64 = vector.multi_reduction <add>, %63, %cst_35 [1] : vector<8x128xf32> to vector<8xf32>
    %65 = vector.shape_cast %64 : vector<8xf32> to vector<8x1xf32>
    %cst_36 = arith.constant 0.0416666679 : f32
    %66 = vector.broadcast %cst_36 : f32 to vector<8x1xf32>
    %67 = arith.mulf %65, %66 : vector<8x1xf32>
    %68 = vector.broadcast %67 : vector<8x1xf32> to vector<8x128xf32>
    %69 = arith.subf %55, %68 : vector<8x128xf32>
    %cst_37 = arith.constant 0.000000e+00 : f32
    %70 = vector.broadcast %cst_37 : f32 to vector<8x128xf32>
    %71 = arith.select %61, %69, %70 : vector<8x128xi1>, vector<8x128xf32>
    %72 = arith.mulf %71, %71 : vector<8x128xf32>
    %cst_38 = arith.constant dense<0.000000e+00> : vector<8xf32>
    %73 = vector.multi_reduction <add>, %72, %cst_38 [1] : vector<8x128xf32> to vector<8xf32>
    %74 = vector.shape_cast %73 : vector<8xf32> to vector<8x1xf32>
    %cst_39 = arith.constant 0.0416666679 : f32
    %75 = vector.broadcast %cst_39 : f32 to vector<8x1xf32>
    %76 = arith.mulf %74, %75 : vector<8x1xf32>
    %77 = vector.broadcast %67 : vector<8x1xf32> to vector<8x128xf32>
    %78 = arith.subf %55, %77 : vector<8x128xf32>
    %cst_40 = arith.constant 9.99999974E-6 : f32
    %79 = vector.broadcast %cst_40 : f32 to vector<8x1xf32>
    %80 = arith.addf %76, %79 : vector<8x1xf32>
    %81 = math.rsqrt %80 : vector<8x1xf32>
    %82 = vector.broadcast %81 : vector<8x1xf32> to vector<8x128xf32>
    %83 = arith.mulf %78, %82 : vector<8x128xf32>
    %84 = vector.broadcast %57 : vector<1x128xf32> to vector<8x128xf32>
    %85 = arith.mulf %83, %84 : vector<8x128xf32>
    %86 = vector.broadcast %59 : vector<1x128xf32> to vector<8x128xf32>
    %87 = arith.addf %85, %86 : vector<8x128xf32>
    %cst_41 = arith.constant 0.000000e+00 : f32
    %88 = vector.broadcast %cst_41 : f32 to vector<8x128xf32>
    %89 = arith.select %61, %87, %88 : vector<8x128xi1>, vector<8x128xf32>
    %90 = arith.negf %89 : vector<8x128xf32>
    %91 = math.exp %90 : vector<8x128xf32>
    %cst_42 = arith.constant 1.000000e+00 : f32
    %92 = vector.broadcast %cst_42 : f32 to vector<8x128xf32>
    %93 = arith.addf %92, %91 : vector<8x128xf32>
    %94 = arith.divf %92, %93 : vector<8x128xf32>
    %95 = arith.mulf %89, %94 : vector<8x128xf32>
    %c2 = arith.constant 2 : index
    %c0_43 = arith.constant 0 : index
    %c0_44 = arith.constant 0 : index
    %96 = vector.load %arg1[%c2, %c0_43, %c0_44] : memref<5x128x128xf32, #tpu.memory_space<vmem>>, vector<1x128x128xf32>
    %97 = vector.shape_cast %96 : vector<1x128x128xf32> to vector<128x128xf32>
    %cst_45 = arith.constant dense<0.000000e+00> : vector<8x128xf32>
    %98 = tpu.matmul %95, %97, %cst_45 {dimension_numbers = #tpu.dot_dimension_numbers<[1], [0], [0], [1], [0, 0, 1, 1], [], []>} : vector<8x128xf32>, vector<128x128xf32>, vector<8x128xf32> -> vector<8x128xf32>
    %c2_46 = arith.constant 2 : index
    %c0_47 = arith.constant 0 : index
    %c0_48 = arith.constant 0 : index
    %99 = vector.load %arg2[%c2_46, %c0_47, %c0_48] : memref<5x1x128xf32, #tpu.memory_space<vmem>>, vector<1x1x128xf32>
    %100 = vector.shape_cast %99 : vector<1x1x128xf32> to vector<1x128xf32>
    %101 = vector.broadcast %100 : vector<1x128xf32> to vector<8x128xf32>
    %102 = arith.addf %98, %101 : vector<8x128xf32>
    %c2_49 = arith.constant 2 : index
    %c0_50 = arith.constant 0 : index
    %c0_51 = arith.constant 0 : index
    %103 = vector.load %arg3[%c2_49, %c0_50, %c0_51] : memref<5x1x128xf32, #tpu.memory_space<vmem>>, vector<1x1x128xf32>
    %104 = vector.shape_cast %103 : vector<1x1x128xf32> to vector<1x128xf32>
    %c2_52 = arith.constant 2 : index
    %c0_53 = arith.constant 0 : index
    %c0_54 = arith.constant 0 : index
    %105 = vector.load %arg4[%c2_52, %c0_53, %c0_54] : memref<5x1x128xf32, #tpu.memory_space<vmem>>, vector<1x1x128xf32>
    %106 = vector.shape_cast %105 : vector<1x1x128xf32> to vector<1x128xf32>
    %c16_i32 = arith.constant 16 : i32
    %107 = vector.broadcast %c16_i32 : i32 to vector<8x128xi32>
    %108 = arith.cmpi slt, %1, %107 : vector<8x128xi32>
    %cst_55 = arith.constant 0.000000e+00 : f32
    %109 = vector.broadcast %cst_55 : f32 to vector<8x128xf32>
    %110 = arith.select %108, %102, %109 : vector<8x128xi1>, vector<8x128xf32>
    %cst_56 = arith.constant dense<0.000000e+00> : vector<8xf32>
    %111 = vector.multi_reduction <add>, %110, %cst_56 [1] : vector<8x128xf32> to vector<8xf32>
    %112 = vector.shape_cast %111 : vector<8xf32> to vector<8x1xf32>
    %cst_57 = arith.constant 6.250000e-02 : f32
    %113 = vector.broadcast %cst_57 : f32 to vector<8x1xf32>
    %114 = arith.mulf %112, %113 : vector<8x1xf32>
    %115 = vector.broadcast %114 : vector<8x1xf32> to vector<8x128xf32>
    %116 = arith.subf %102, %115 : vector<8x128xf32>
    %cst_58 = arith.constant 0.000000e+00 : f32
    %117 = vector.broadcast %cst_58 : f32 to vector<8x128xf32>
    %118 = arith.select %108, %116, %117 : vector<8x128xi1>, vector<8x128xf32>
    %119 = arith.mulf %118, %118 : vector<8x128xf32>
    %cst_59 = arith.constant dense<0.000000e+00> : vector<8xf32>
    %120 = vector.multi_reduction <add>, %119, %cst_59 [1] : vector<8x128xf32> to vector<8xf32>
    %121 = vector.shape_cast %120 : vector<8xf32> to vector<8x1xf32>
    %cst_60 = arith.constant 6.250000e-02 : f32
    %122 = vector.broadcast %cst_60 : f32 to vector<8x1xf32>
    %123 = arith.mulf %121, %122 : vector<8x1xf32>
    %124 = vector.broadcast %114 : vector<8x1xf32> to vector<8x128xf32>
    %125 = arith.subf %102, %124 : vector<8x128xf32>
    %cst_61 = arith.constant 9.99999974E-6 : f32
    %126 = vector.broadcast %cst_61 : f32 to vector<8x1xf32>
    %127 = arith.addf %123, %126 : vector<8x1xf32>
    %128 = math.rsqrt %127 : vector<8x1xf32>
    %129 = vector.broadcast %128 : vector<8x1xf32> to vector<8x128xf32>
    %130 = arith.mulf %125, %129 : vector<8x128xf32>
    %131 = vector.broadcast %104 : vector<1x128xf32> to vector<8x128xf32>
    %132 = arith.mulf %130, %131 : vector<8x128xf32>
    %133 = vector.broadcast %106 : vector<1x128xf32> to vector<8x128xf32>
    %134 = arith.addf %132, %133 : vector<8x128xf32>
    %cst_62 = arith.constant 0.000000e+00 : f32
    %135 = vector.broadcast %cst_62 : f32 to vector<8x128xf32>
    %136 = arith.select %108, %134, %135 : vector<8x128xi1>, vector<8x128xf32>
    %137 = arith.negf %136 : vector<8x128xf32>
    %138 = math.exp %137 : vector<8x128xf32>
    %cst_63 = arith.constant 1.000000e+00 : f32
    %139 = vector.broadcast %cst_63 : f32 to vector<8x128xf32>
    %140 = arith.addf %139, %138 : vector<8x128xf32>
    %141 = arith.divf %139, %140 : vector<8x128xf32>
    %142 = arith.mulf %136, %141 : vector<8x128xf32>
    %c3 = arith.constant 3 : index
    %c0_64 = arith.constant 0 : index
    %c0_65 = arith.constant 0 : index
    %143 = vector.load %arg1[%c3, %c0_64, %c0_65] : memref<5x128x128xf32, #tpu.memory_space<vmem>>, vector<1x128x128xf32>
    %144 = vector.shape_cast %143 : vector<1x128x128xf32> to vector<128x128xf32>
    %cst_66 = arith.constant dense<0.000000e+00> : vector<8x128xf32>
    %145 = tpu.matmul %142, %144, %cst_66 {dimension_numbers = #tpu.dot_dimension_numbers<[1], [0], [0], [1], [0, 0, 1, 1], [], []>} : vector<8x128xf32>, vector<128x128xf32>, vector<8x128xf32> -> vector<8x128xf32>
    %c3_67 = arith.constant 3 : index
    %c0_68 = arith.constant 0 : index
    %c0_69 = arith.constant 0 : index
    %146 = vector.load %arg2[%c3_67, %c0_68, %c0_69] : memref<5x1x128xf32, #tpu.memory_space<vmem>>, vector<1x1x128xf32>
    %147 = vector.shape_cast %146 : vector<1x1x128xf32> to vector<1x128xf32>
    %148 = vector.broadcast %147 : vector<1x128xf32> to vector<8x128xf32>
    %149 = arith.addf %145, %148 : vector<8x128xf32>
    %c3_70 = arith.constant 3 : index
    %c0_71 = arith.constant 0 : index
    %c0_72 = arith.constant 0 : index
    %150 = vector.load %arg3[%c3_70, %c0_71, %c0_72] : memref<5x1x128xf32, #tpu.memory_space<vmem>>, vector<1x1x128xf32>
    %151 = vector.shape_cast %150 : vector<1x1x128xf32> to vector<1x128xf32>
    %c3_73 = arith.constant 3 : index
    %c0_74 = arith.constant 0 : index
    %c0_75 = arith.constant 0 : index
    %152 = vector.load %arg4[%c3_73, %c0_74, %c0_75] : memref<5x1x128xf32, #tpu.memory_space<vmem>>, vector<1x1x128xf32>
    %153 = vector.shape_cast %152 : vector<1x1x128xf32> to vector<1x128xf32>
    %c24_i32_76 = arith.constant 24 : i32
    %154 = vector.broadcast %c24_i32_76 : i32 to vector<8x128xi32>
    %155 = arith.cmpi slt, %1, %154 : vector<8x128xi32>
    %cst_77 = arith.constant 0.000000e+00 : f32
    %156 = vector.broadcast %cst_77 : f32 to vector<8x128xf32>
    %157 = arith.select %155, %149, %156 : vector<8x128xi1>, vector<8x128xf32>
    %cst_78 = arith.constant dense<0.000000e+00> : vector<8xf32>
    %158 = vector.multi_reduction <add>, %157, %cst_78 [1] : vector<8x128xf32> to vector<8xf32>
    %159 = vector.shape_cast %158 : vector<8xf32> to vector<8x1xf32>
    %cst_79 = arith.constant 0.0416666679 : f32
    %160 = vector.broadcast %cst_79 : f32 to vector<8x1xf32>
    %161 = arith.mulf %159, %160 : vector<8x1xf32>
    %162 = vector.broadcast %161 : vector<8x1xf32> to vector<8x128xf32>
    %163 = arith.subf %149, %162 : vector<8x128xf32>
    %cst_80 = arith.constant 0.000000e+00 : f32
    %164 = vector.broadcast %cst_80 : f32 to vector<8x128xf32>
    %165 = arith.select %155, %163, %164 : vector<8x128xi1>, vector<8x128xf32>
    %166 = arith.mulf %165, %165 : vector<8x128xf32>
    %cst_81 = arith.constant dense<0.000000e+00> : vector<8xf32>
    %167 = vector.multi_reduction <add>, %166, %cst_81 [1] : vector<8x128xf32> to vector<8xf32>
    %168 = vector.shape_cast %167 : vector<8xf32> to vector<8x1xf32>
    %cst_82 = arith.constant 0.0416666679 : f32
    %169 = vector.broadcast %cst_82 : f32 to vector<8x1xf32>
    %170 = arith.mulf %168, %169 : vector<8x1xf32>
    %171 = vector.broadcast %161 : vector<8x1xf32> to vector<8x128xf32>
    %172 = arith.subf %149, %171 : vector<8x128xf32>
    %cst_83 = arith.constant 9.99999974E-6 : f32
    %173 = vector.broadcast %cst_83 : f32 to vector<8x1xf32>
    %174 = arith.addf %170, %173 : vector<8x1xf32>
    %175 = math.rsqrt %174 : vector<8x1xf32>
    %176 = vector.broadcast %175 : vector<8x1xf32> to vector<8x128xf32>
    %177 = arith.mulf %172, %176 : vector<8x128xf32>
    %178 = vector.broadcast %151 : vector<1x128xf32> to vector<8x128xf32>
    %179 = arith.mulf %177, %178 : vector<8x128xf32>
    %180 = vector.broadcast %153 : vector<1x128xf32> to vector<8x128xf32>
    %181 = arith.addf %179, %180 : vector<8x128xf32>
    %cst_84 = arith.constant 0.000000e+00 : f32
    %182 = vector.broadcast %cst_84 : f32 to vector<8x128xf32>
    %183 = arith.select %155, %181, %182 : vector<8x128xi1>, vector<8x128xf32>
    %184 = arith.negf %183 : vector<8x128xf32>
    %185 = math.exp %184 : vector<8x128xf32>
    %cst_85 = arith.constant 1.000000e+00 : f32
    %186 = vector.broadcast %cst_85 : f32 to vector<8x128xf32>
    %187 = arith.addf %186, %185 : vector<8x128xf32>
    %188 = arith.divf %186, %187 : vector<8x128xf32>
    %189 = arith.mulf %183, %188 : vector<8x128xf32>
    %190 = arith.addf %189, %95 : vector<8x128xf32>
    %c1_86 = arith.constant 1 : index
    %c0_87 = arith.constant 0 : index
    %c0_88 = arith.constant 0 : index
    %191 = vector.load %arg5[%c1_86, %c0_87, %c0_88] : memref<2x1x128xf32, #tpu.memory_space<vmem>>, vector<1x1x128xf32>
    %192 = vector.shape_cast %191 : vector<1x1x128xf32> to vector<1x128xf32>
    %c1_89 = arith.constant 1 : index
    %c0_90 = arith.constant 0 : index
    %c0_91 = arith.constant 0 : index
    %193 = vector.load %arg6[%c1_89, %c0_90, %c0_91] : memref<2x1x128xf32, #tpu.memory_space<vmem>>, vector<1x1x128xf32>
    %194 = vector.shape_cast %193 : vector<1x1x128xf32> to vector<1x128xf32>
    %c24_i32_92 = arith.constant 24 : i32
    %195 = vector.broadcast %c24_i32_92 : i32 to vector<8x128xi32>
    %196 = arith.cmpi slt, %1, %195 : vector<8x128xi32>
    %cst_93 = arith.constant 0.000000e+00 : f32
    %197 = vector.broadcast %cst_93 : f32 to vector<8x128xf32>
    %198 = arith.select %196, %190, %197 : vector<8x128xi1>, vector<8x128xf32>
    %cst_94 = arith.constant dense<0.000000e+00> : vector<8xf32>
    %199 = vector.multi_reduction <add>, %198, %cst_94 [1] : vector<8x128xf32> to vector<8xf32>
    %200 = vector.shape_cast %199 : vector<8xf32> to vector<8x1xf32>
    %cst_95 = arith.constant 0.0416666679 : f32
    %201 = vector.broadcast %cst_95 : f32 to vector<8x1xf32>
    %202 = arith.mulf %200, %201 : vector<8x1xf32>
    %203 = vector.broadcast %202 : vector<8x1xf32> to vector<8x128xf32>
    %204 = arith.subf %190, %203 : vector<8x128xf32>
    %cst_96 = arith.constant 0.000000e+00 : f32
    %205 = vector.broadcast %cst_96 : f32 to vector<8x128xf32>
    %206 = arith.select %196, %204, %205 : vector<8x128xi1>, vector<8x128xf32>
    %207 = arith.mulf %206, %206 : vector<8x128xf32>
    %cst_97 = arith.constant dense<0.000000e+00> : vector<8xf32>
    %208 = vector.multi_reduction <add>, %207, %cst_97 [1] : vector<8x128xf32> to vector<8xf32>
    %209 = vector.shape_cast %208 : vector<8xf32> to vector<8x1xf32>
    %cst_98 = arith.constant 0.0416666679 : f32
    %210 = vector.broadcast %cst_98 : f32 to vector<8x1xf32>
    %211 = arith.mulf %209, %210 : vector<8x1xf32>
    %212 = vector.broadcast %202 : vector<8x1xf32> to vector<8x128xf32>
    %213 = arith.subf %190, %212 : vector<8x128xf32>
    %cst_99 = arith.constant 9.99999974E-6 : f32
    %214 = vector.broadcast %cst_99 : f32 to vector<8x1xf32>
    %215 = arith.addf %211, %214 : vector<8x1xf32>
    %216 = math.rsqrt %215 : vector<8x1xf32>
    %217 = vector.broadcast %216 : vector<8x1xf32> to vector<8x128xf32>
    %218 = arith.mulf %213, %217 : vector<8x128xf32>
    %219 = vector.broadcast %192 : vector<1x128xf32> to vector<8x128xf32>
    %220 = arith.mulf %218, %219 : vector<8x128xf32>
    %221 = vector.broadcast %194 : vector<1x128xf32> to vector<8x128xf32>
    %222 = arith.addf %220, %221 : vector<8x128xf32>
    %cst_100 = arith.constant 0.000000e+00 : f32
    %223 = vector.broadcast %cst_100 : f32 to vector<8x128xf32>
    %224 = arith.select %196, %222, %223 : vector<8x128xi1>, vector<8x128xf32>
    %c4 = arith.constant 4 : index
    %c0_101 = arith.constant 0 : index
    %c0_102 = arith.constant 0 : index
    %225 = vector.load %arg1[%c4, %c0_101, %c0_102] : memref<5x128x128xf32, #tpu.memory_space<vmem>>, vector<1x128x128xf32>
    %226 = vector.shape_cast %225 : vector<1x128x128xf32> to vector<128x128xf32>
    %cst_103 = arith.constant dense<0.000000e+00> : vector<8x128xf32>
    %227 = tpu.matmul %224, %226, %cst_103 {dimension_numbers = #tpu.dot_dimension_numbers<[1], [0], [0], [1], [0, 0, 1, 1], [], []>} : vector<8x128xf32>, vector<128x128xf32>, vector<8x128xf32> -> vector<8x128xf32>
    %c4_104 = arith.constant 4 : index
    %c0_105 = arith.constant 0 : index
    %c0_106 = arith.constant 0 : index
    %228 = vector.load %arg2[%c4_104, %c0_105, %c0_106] : memref<5x1x128xf32, #tpu.memory_space<vmem>>, vector<1x1x128xf32>
    %229 = vector.shape_cast %228 : vector<1x1x128xf32> to vector<1x128xf32>
    %230 = vector.broadcast %229 : vector<1x128xf32> to vector<8x128xf32>
    %231 = arith.addf %227, %230 : vector<8x128xf32>
    %c4_107 = arith.constant 4 : index
    %c0_108 = arith.constant 0 : index
    %c0_109 = arith.constant 0 : index
    %232 = vector.load %arg3[%c4_107, %c0_108, %c0_109] : memref<5x1x128xf32, #tpu.memory_space<vmem>>, vector<1x1x128xf32>
    %233 = vector.shape_cast %232 : vector<1x1x128xf32> to vector<1x128xf32>
    %c4_110 = arith.constant 4 : index
    %c0_111 = arith.constant 0 : index
    %c0_112 = arith.constant 0 : index
    %234 = vector.load %arg4[%c4_110, %c0_111, %c0_112] : memref<5x1x128xf32, #tpu.memory_space<vmem>>, vector<1x1x128xf32>
    %235 = vector.shape_cast %234 : vector<1x1x128xf32> to vector<1x128xf32>
    %c32_i32_113 = arith.constant 32 : i32
    %236 = vector.broadcast %c32_i32_113 : i32 to vector<8x128xi32>
    %237 = arith.cmpi slt, %1, %236 : vector<8x128xi32>
    %cst_114 = arith.constant 0.000000e+00 : f32
    %238 = vector.broadcast %cst_114 : f32 to vector<8x128xf32>
    %239 = arith.select %237, %231, %238 : vector<8x128xi1>, vector<8x128xf32>
    %cst_115 = arith.constant dense<0.000000e+00> : vector<8xf32>
    %240 = vector.multi_reduction <add>, %239, %cst_115 [1] : vector<8x128xf32> to vector<8xf32>
    %241 = vector.shape_cast %240 : vector<8xf32> to vector<8x1xf32>
    %cst_116 = arith.constant 3.125000e-02 : f32
    %242 = vector.broadcast %cst_116 : f32 to vector<8x1xf32>
    %243 = arith.mulf %241, %242 : vector<8x1xf32>
    %244 = vector.broadcast %243 : vector<8x1xf32> to vector<8x128xf32>
    %245 = arith.subf %231, %244 : vector<8x128xf32>
    %cst_117 = arith.constant 0.000000e+00 : f32
    %246 = vector.broadcast %cst_117 : f32 to vector<8x128xf32>
    %247 = arith.select %237, %245, %246 : vector<8x128xi1>, vector<8x128xf32>
    %248 = arith.mulf %247, %247 : vector<8x128xf32>
    %cst_118 = arith.constant dense<0.000000e+00> : vector<8xf32>
    %249 = vector.multi_reduction <add>, %248, %cst_118 [1] : vector<8x128xf32> to vector<8xf32>
    %250 = vector.shape_cast %249 : vector<8xf32> to vector<8x1xf32>
    %cst_119 = arith.constant 3.125000e-02 : f32
    %251 = vector.broadcast %cst_119 : f32 to vector<8x1xf32>
    %252 = arith.mulf %250, %251 : vector<8x1xf32>
    %253 = vector.broadcast %243 : vector<8x1xf32> to vector<8x128xf32>
    %254 = arith.subf %231, %253 : vector<8x128xf32>
    %cst_120 = arith.constant 9.99999974E-6 : f32
    %255 = vector.broadcast %cst_120 : f32 to vector<8x1xf32>
    %256 = arith.addf %252, %255 : vector<8x1xf32>
    %257 = math.rsqrt %256 : vector<8x1xf32>
    %258 = vector.broadcast %257 : vector<8x1xf32> to vector<8x128xf32>
    %259 = arith.mulf %254, %258 : vector<8x128xf32>
    %260 = vector.broadcast %233 : vector<1x128xf32> to vector<8x128xf32>
    %261 = arith.mulf %259, %260 : vector<8x128xf32>
    %262 = vector.broadcast %235 : vector<1x128xf32> to vector<8x128xf32>
    %263 = arith.addf %261, %262 : vector<8x128xf32>
    %cst_121 = arith.constant 0.000000e+00 : f32
    %264 = vector.broadcast %cst_121 : f32 to vector<8x128xf32>
    %265 = arith.select %237, %263, %264 : vector<8x128xi1>, vector<8x128xf32>
    %266 = arith.negf %265 : vector<8x128xf32>
    %267 = math.exp %266 : vector<8x128xf32>
    %cst_122 = arith.constant 1.000000e+00 : f32
    %268 = vector.broadcast %cst_122 : f32 to vector<8x128xf32>
    %269 = arith.addf %268, %267 : vector<8x128xf32>
    %270 = arith.divf %268, %269 : vector<8x128xf32>
    %271 = arith.mulf %265, %270 : vector<8x128xf32>
    %272 = arith.addf %271, %48 : vector<8x128xf32>
    %c0_123 = arith.constant 0 : index
    %c0_124 = arith.constant 0 : index
    %c0_125 = arith.constant 0 : index
    %273 = vector.load %arg5[%c0_123, %c0_124, %c0_125] : memref<2x1x128xf32, #tpu.memory_space<vmem>>, vector<1x1x128xf32>
    %274 = vector.shape_cast %273 : vector<1x1x128xf32> to vector<1x128xf32>
    %c0_126 = arith.constant 0 : index
    %c0_127 = arith.constant 0 : index
    %c0_128 = arith.constant 0 : index
    %275 = vector.load %arg6[%c0_126, %c0_127, %c0_128] : memref<2x1x128xf32, #tpu.memory_space<vmem>>, vector<1x1x128xf32>
    %276 = vector.shape_cast %275 : vector<1x1x128xf32> to vector<1x128xf32>
    %c32_i32_129 = arith.constant 32 : i32
    %277 = vector.broadcast %c32_i32_129 : i32 to vector<8x128xi32>
    %278 = arith.cmpi slt, %1, %277 : vector<8x128xi32>
    %cst_130 = arith.constant 0.000000e+00 : f32
    %279 = vector.broadcast %cst_130 : f32 to vector<8x128xf32>
    %280 = arith.select %278, %272, %279 : vector<8x128xi1>, vector<8x128xf32>
    %cst_131 = arith.constant dense<0.000000e+00> : vector<8xf32>
    %281 = vector.multi_reduction <add>, %280, %cst_131 [1] : vector<8x128xf32> to vector<8xf32>
    %282 = vector.shape_cast %281 : vector<8xf32> to vector<8x1xf32>
    %cst_132 = arith.constant 3.125000e-02 : f32
    %283 = vector.broadcast %cst_132 : f32 to vector<8x1xf32>
    %284 = arith.mulf %282, %283 : vector<8x1xf32>
    %285 = vector.broadcast %284 : vector<8x1xf32> to vector<8x128xf32>
    %286 = arith.subf %272, %285 : vector<8x128xf32>
    %cst_133 = arith.constant 0.000000e+00 : f32
    %287 = vector.broadcast %cst_133 : f32 to vector<8x128xf32>
    %288 = arith.select %278, %286, %287 : vector<8x128xi1>, vector<8x128xf32>
    %289 = arith.mulf %288, %288 : vector<8x128xf32>
    %cst_134 = arith.constant dense<0.000000e+00> : vector<8xf32>
    %290 = vector.multi_reduction <add>, %289, %cst_134 [1] : vector<8x128xf32> to vector<8xf32>
    %291 = vector.shape_cast %290 : vector<8xf32> to vector<8x1xf32>
    %cst_135 = arith.constant 3.125000e-02 : f32
    %292 = vector.broadcast %cst_135 : f32 to vector<8x1xf32>
    %293 = arith.mulf %291, %292 : vector<8x1xf32>
    %294 = vector.broadcast %284 : vector<8x1xf32> to vector<8x128xf32>
    %295 = arith.subf %272, %294 : vector<8x128xf32>
    %cst_136 = arith.constant 9.99999974E-6 : f32
    %296 = vector.broadcast %cst_136 : f32 to vector<8x1xf32>
    %297 = arith.addf %293, %296 : vector<8x1xf32>
    %298 = math.rsqrt %297 : vector<8x1xf32>
    %299 = vector.broadcast %298 : vector<8x1xf32> to vector<8x128xf32>
    %300 = arith.mulf %295, %299 : vector<8x128xf32>
    %301 = vector.broadcast %274 : vector<1x128xf32> to vector<8x128xf32>
    %302 = arith.mulf %300, %301 : vector<8x128xf32>
    %303 = vector.broadcast %276 : vector<1x128xf32> to vector<8x128xf32>
    %304 = arith.addf %302, %303 : vector<8x128xf32>
    %cst_137 = arith.constant 0.000000e+00 : f32
    %305 = vector.broadcast %cst_137 : f32 to vector<8x128xf32>
    %306 = arith.select %278, %304, %305 : vector<8x128xi1>, vector<8x128xf32>
    %c0_138 = arith.constant 0 : index
    %c0_139 = arith.constant 0 : index
    %307 = vector.load %arg7[%c0_138, %c0_139] : memref<8x128xf32, #tpu.memory_space<vmem>>, vector<8x128xf32>
    tpu.vector_store %arg7[%c0_138, %c0_139], %306 {strides = array<i32>} : memref<8x128xf32, #tpu.memory_space<vmem>>, vector<8x128xf32>,
    return
  }
}

</mosaic_0001>

<llo_original>
// kernel: synapse_unet_forward.1
$region0: #{synapse_unet_forward.1}
  #allocation0 [shape = 'u32[]', space=smem, size = 0x4, offset = 0x4, fixed_abs, tag = 'smem constant byte address 0x4 - core index']
  #allocation1 [shape = 'u32[144,128]{1,0:T(1,128)}', space=vmem, size = 0x12000, scoped, tag = 'internal scratch']
  %s0 = inlined_call_operand.vmem [shape: f32[8,128], index: 0, kind: input, shape index: {}]
  %s1 = inlined_call_operand.hbm [shape: f32[5,128,128], index: 1, kind: input, shape index: {}]
  %s2 = inlined_call_operand.vmem [shape: f32[5,1,128], index: 2, kind: input, shape index: {}]
  %s3 = inlined_call_operand.vmem [shape: f32[5,1,128], index: 3, kind: input, shape index: {}]
  %s4 = inlined_call_operand.vmem [shape: f32[5,1,128], index: 4, kind: input, shape index: {}]
  %s5 = inlined_call_operand.vmem [shape: f32[2,1,128], index: 5, kind: input, shape index: {}]
  %s6 = inlined_call_operand.vmem [shape: f32[2,1,128], index: 6, kind: input, shape index: {}]
  %s7 = inlined_call_operand.hbm [shape: f32[8,128], index: 7, kind: output, shape index: {}]
  %s8 = sld [smem:[#allocation0]]
  $region42: #{synapse_unet_forward.1} parent=0
    _
  %s10 = ssub.s32 1, %s8
  %s11 = scalar_select 0, %s10, %s8
  $region1: #{synapse_unet_forward.1} parent=0
    #allocation2 [shape = 'u8[327680]{0}', space=vmem, size = 0x50000, scoped, tag = 'input window, operand 1, single buffered']
    #allocation3 [shape = 's32[1]{0}', space=sflag, size = 0x4, scoped, tag = 'scoped memory for synapse_unet_forward.1']
    #allocation4 [shape = 's32[1]{0}', space=sflag, size = 0x4, scoped, tag = 'scoped memory for synapse_unet_forward.1']
    #allocation5 [shape = 'u8[4096]{0}', space=vmem, size = 0x1000, scoped, tag = 'output window, operand 0, single buffered']
    %12 = vsyncpa [#allocation3], 0
    %13 = vsyncpa [#allocation4], 0
    // Predicated region
    $region2: #{synapse_unet_forward.1} parent=1 // pred_check
      _
    $region3: #{synapse_unet_forward.1} parent=1 // pred_check_branch
      %15 = sbr.rel (0) target = $region5
    $region4: #{synapse_unet_forward.1} parent=1 // pred_region
      _
    $region5: #{synapse_unet_forward.1} parent=1 // pred_fallthru
      _
    // Predicated region
    $region6: #{synapse_unet_forward.1} parent=1 // pred_check
      _
    $region7: #{synapse_unet_forward.1} parent=1 // pred_check_branch
      %17 = sbr.rel (0) target = $region9
    $region8: #{synapse_unet_forward.1} parent=1 // pred_region
      %s19 = ssub.s32 10240, 10240
      %20 = vsyncadd [#allocation3], %s19
      %s21 = sshll.u32 [#allocation2], 4
      %s22 = int_to_ptr.vmem [resolvable:$true] %s21
      %27 = dma.hbm_to_vmem [thread:$0]  %s1, 10240, %s22, [#allocation3], 128, 128, 8
    $region9: #{synapse_unet_forward.1} parent=1 // pred_fallthru
      _
    // Predicated region
    $region10: #{synapse_unet_forward.1} parent=1 // pred_check
      _
    $region11: #{synapse_unet_forward.1} parent=1 // pred_check_branch
      %29 = sbr.rel (0) target = $region13
    $region12: #{synapse_unet_forward.1} parent=1 // pred_region
      _
    $region13: #{synapse_unet_forward.1} parent=1 // pred_fallthru
      _
    // Predicated region
    $region14: #{synapse_unet_forward.1} parent=1 // pred_check
      _
    $region15: #{synapse_unet_forward.1} parent=1 // pred_check_branch
      %31 = sbr.rel (0) target = $region17
    $region16: #{synapse_unet_forward.1} parent=1 // pred_region
      _
    $region17: #{synapse_unet_forward.1} parent=1 // pred_fallthru
      _
    // Predicated region
    $region18: #{synapse_unet_forward.1} parent=1 // pred_check
      _
    $region19: #{synapse_unet_forward.1} parent=1 // pred_check_branch
      %33 = sbr.rel (0) target = $region21
    $region20: #{synapse_unet_forward.1} parent=1 // pred_region
      _
    $region21: #{synapse_unet_forward.1} parent=1 // pred_fallthru
      _
    // Predicated region
    $region22: #{synapse_unet_forward.1} parent=1 // pred_check
      _
    $region23: #{synapse_unet_forward.1} parent=1 // pred_check_branch
      %35 = sbr.rel (0) target = $region25
    $region24: #{synapse_unet_forward.1} parent=1 // pred_region
      _
    $region25: #{synapse_unet_forward.1} parent=1 // pred_fallthru
      _
    // Predicated region
    $region26: #{synapse_unet_forward.1} parent=1 // pred_check
      _
    $region27: #{synapse_unet_forward.1} parent=1 // pred_check_branch
      %37 = sbr.rel (0) target = $region29
    $region28: #{synapse_unet_forward.1} parent=1 // pred_region
      _
    $region29: #{synapse_unet_forward.1} parent=1 // pred_fallthru
      _
    // Predicated region
    $region30: #{synapse_unet_forward.1} parent=1 // pred_check
      _
    $region31: #{synapse_unet_forward.1} parent=1 // pred_check_branch
      %39 = sbr.rel (0) target = $region33
    $region32: #{synapse_unet_forward.1} parent=1 // pred_region
      %40 = dma.done [#allocation3], 10240
    $region33: #{synapse_unet_forward.1} parent=1 // pred_fallthru
      _
    %v41 = vld [vmem:[%s0] sm:$0xff]
    %v42 = vlaneseq
    %v43 = vand.u32 %v42, 127
    %v44 = vld [vmem:[#allocation2] sm:$0xff]
    %v45 = vld [vmem:[#allocation2 + $0x8] sm:$0xff]
    %v46 = vld [vmem:[#allocation2 + $0x10] sm:$0xff]
    %v47 = vld [vmem:[#allocation2 + $0x18] sm:$0xff]
    %v48 = vld [vmem:[#allocation2 + $0x20] sm:$0xff]
    %v49 = vld [vmem:[#allocation2 + $0x28] sm:$0xff]
    %v50 = vld [vmem:[#allocation2 + $0x30] sm:$0xff]
    %v51 = vld [vmem:[#allocation2 + $0x38] sm:$0xff]
    %v52 = vld [vmem:[#allocation2 + $0x40] sm:$0xff]
    %v53 = vld [vmem:[#allocation2 + $0x48] sm:$0xff]
    %v54 = vld [vmem:[#allocation2 + $0x50] sm:$0xff]
    %v55 = vld [vmem:[#allocation2 + $0x58] sm:$0xff]
    %v56 = vld [vmem:[#allocation2 + $0x60] sm:$0xff]
    %v57 = vld [vmem:[#allocation2 + $0x68] sm:$0xff]
    %v58 = vld [vmem:[#allocation2 + $0x70] sm:$0xff]
    %v59 = vld [vmem:[#allocation2 + $0x78] sm:$0xff]
    %v60 = vld [vmem:[%s2] sm:$0x1]
    %v62 = vlaneseq
    %v63 = vshrl.u32 %v62, 7
    %v64 = vsub.s32 0, %v63
    %v65 = vrot.slane %v60, %v64
    %67 = vmatprep.subr.mxu0 0.0
    %68 = vmatpush1.msra.mxu0 %v59
    %69 = vmatprep.subr.mxu0 0.0
    %70 = vmatpush1.msra.mxu0 %v58
    %71 = vmatprep.subr.mxu0 0.0
    %72 = vmatpush1.msra.mxu0 %v57
    %73 = vmatprep.subr.mxu0 0.0
    %74 = vmatpush1.msra.mxu0 %v56
    %75 = vmatprep.subr.mxu0 0.0
    %76 = vmatpush1.msra.mxu0 %v55
    %77 = vmatprep.subr.mxu0 0.0
    %78 = vmatpush1.msra.mxu0 %v54
    %79 = vmatprep.subr.mxu0 0.0
    %80 = vmatpush1.msra.mxu0 %v53
    %81 = vmatprep.subr.mxu0 0.0
    %82 = vmatpush1.msra.mxu0 %v52
    %83 = vmatprep.subr.mxu0 0.0
    %84 = vmatpush1.msra.mxu0 %v51
    %85 = vmatprep.subr.mxu0 0.0
    %86 = vmatpush1.msra.mxu0 %v50
    %87 = vmatprep.subr.mxu0 0.0
    %88 = vmatpush1.msra.mxu0 %v49
    %89 = vmatprep.subr.mxu0 0.0
    %90 = vmatpush1.msra.mxu0 %v48
    %91 = vmatprep.subr.mxu0 0.0
    %92 = vmatpush1.msra.mxu0 %v47
    %93 = vmatprep.subr.mxu0 0.0
    %94 = vmatpush1.msra.mxu0 %v46
    %95 = vmatprep.subr.mxu0 0.0
    %96 = vmatpush1.msra.mxu0 %v45
    %97 = vmatprep.subr.mxu0 0.0
    %98 = vmatpush1.msra.mxu0 %v44
    %99 = vmatprep.subr.mxu0 0.0
    %100 = vmatpush2.msra.mxu0 0.0
    %101 = vmatprep.subr.mxu0 0.0
    %102 = vmatpush2.msra.mxu0 0.0
    %103 = vmatprep.subr.mxu0 0.0
    %104 = vmatpush2.msra.mxu0 0.0
    %105 = vmatprep.subr.mxu0 0.0
    %106 = vmatpush2.msra.mxu0 0.0
    %107 = vmatprep.subr.mxu0 0.0
    %108 = vmatpush2.msra.mxu0 0.0
    %109 = vmatprep.subr.mxu0 0.0
    %110 = vmatpush2.msra.mxu0 0.0
    %111 = vmatprep.subr.mxu0 0.0
    %112 = vmatpush2.msra.mxu0 0.0
    %113 = vmatprep.subr.mxu0 0.0
    %114 = vmatpush2.msra.mxu0 0.0
    %115 = vmatprep.subr.mxu0 0.0
    %116 = vmatpush2.msra.mxu0 0.0
    %117 = vmatprep.subr.mxu0 0.0
    %118 = vmatpush2.msra.mxu0 0.0
    %119 = vmatprep.subr.mxu0 0.0
    %120 = vmatpush2.msra.mxu0 0.0
    %121 = vmatprep.subr.mxu0 0.0
    %122 = vmatpush2.msra.mxu0 0.0
    %123 = vmatprep.subr.mxu0 0.0
    %124 = vmatpush2.msra.mxu0 0.0
    %125 = vmatprep.subr.mxu0 0.0
    %126 = vmatpush2.msra.mxu0 0.0
    %127 = vmatprep.subr.mxu0 0.0
    %128 = vmatpush2.msra.mxu0 0.0
    %129 = vmatprep.subr.mxu0 0.0
    %130 = vmatpush2.msra.mxu0 0.0
    %131 = vmatprep.mubr.f32.mxu0 0.0
    %132 = vmatmul.mubr.f32.gmra.mxu0 %v41
    %v133 = vpop.f32.mrf.mxu0
    %v134 = vadd.f32 %v65, %v133
    %v135 = vpop.f32.mrf.mxu0
    %136 = vdwg.mxu0
    %v137 = vld [vmem:[%s3] sm:$0x1]
    %v138 = vld [vmem:[%s4] sm:$0x1]
    %vm139 = vcmp.lt.s32.totalorder %v43, 32
    %v140 = vsel %vm139, %v134, 0.0
    %141 = vadd.xlane.f32.xlu0 %v140
    %v142 = vpop.xlane.xlu0 %141
    %v143 = vmul.f32 %v142, 0.03125
    %v144 = vsub.f32 %v134, %v143
    %v145 = vsel %vm139, %v144, 0.0
    %v146 = vmul.f32 %v145, %v145
    %147 = vadd.xlane.f32.xlu0 %v146
    %v148 = vpop.xlane.xlu0 %147
    %v149 = vmul.f32 %v148, 0.03125
    %v150 = vadd.f32 %v149, 1e-05
    %v151 = vrsqrt.pop %v150
    %v152 = vmul.f32 %v144, %v151
    %v154 = vlaneseq
    %v155 = vshrl.u32 %v154, 7
    %v156 = vsub.s32 0, %v155
    %v157 = vrot.slane %v137, %v156
    %v159 = vmul.f32 %v152, %v157
    %v161 = vlaneseq
    %v162 = vshrl.u32 %v161, 7
    %v163 = vsub.s32 0, %v162
    %v164 = vrot.slane %v138, %v163
    %v166 = vadd.f32 %v159, %v164
    %v167 = vsel %vm139, %v166, 0.0
    %v168 = vxor.u32 %v167, 2147483648
    %v169 = vmul.f32 %v168, 1.442695
    %v170 = vpow.pop %v169
    %v171 = vadd.f32 %v170, 1.0
    %v172 = vrcp.pop %v171
    %v173 = vmul.f32 1.0, %v172
    %v174 = vmul.f32 %v167, %v173
    %s175 = scalar_lea.vmem [#allocation2], 128
    %v176 = vld [vmem:[%s175] sm:$0xff]
    %v177 = vld [vmem:[%s175 + $0x8] sm:$0xff]
    %v178 = vld [vmem:[%s175 + $0x10] sm:$0xff]
    %v179 = vld [vmem:[%s175 + $0x18] sm:$0xff]
    %v180 = vld [vmem:[%s175 + $0x20] sm:$0xff]
    %v181 = vld [vmem:[%s175 + $0x28] sm:$0xff]
    %v182 = vld [vmem:[%s175 + $0x30] sm:$0xff]
    %v183 = vld [vmem:[%s175 + $0x38] sm:$0xff]
    %v184 = vld [vmem:[%s175 + $0x40] sm:$0xff]
    %v185 = vld [vmem:[%s175 + $0x48] sm:$0xff]
    %v186 = vld [vmem:[%s175 + $0x50] sm:$0xff]
    %v187 = vld [vmem:[%s175 + $0x58] sm:$0xff]
    %v188 = vld [vmem:[%s175 + $0x60] sm:$0xff]
    %v189 = vld [vmem:[%s175 + $0x68] sm:$0xff]
    %v190 = vld [vmem:[%s175 + $0x70] sm:$0xff]
    %v191 = vld [vmem:[%s175 + $0x78] sm:$0xff]
    %s192 = scalar_lea.vmem %s2, 1
    %v193 = vld [vmem:[%s192] sm:$0x1]
    %v195 = vlaneseq
    %v196 = vshrl.u32 %v195, 7
    %v197 = vsub.s32 0, %v196
    %v198 = vrot.slane %v193, %v197
    %200 = vmatprep.subr.mxu0 0.0
    %201 = vmatpush1.msra.mxu0 %v191
    %202 = vmatprep.subr.mxu0 0.0
    %203 = vmatpush1.msra.mxu0 %v190
    %204 = vmatprep.subr.mxu0 0.0
    %205 = vmatpush1.msra.mxu0 %v189
    %206 = vmatprep.subr.mxu0 0.0
    %207 = vmatpush1.msra.mxu0 %v188
    %208 = vmatprep.subr.mxu0 0.0
    %209 = vmatpush1.msra.mxu0 %v187
    %210 = vmatprep.subr.mxu0 0.0
    %211 = vmatpush1.msra.mxu0 %v186
    %212 = vmatprep.subr.mxu0 0.0
    %213 = vmatpush1.msra.mxu0 %v185
    %214 = vmatprep.subr.mxu0 0.0
    %215 = vmatpush1.msra.mxu0 %v184
    %216 = vmatprep.subr.mxu0 0.0
    %217 = vmatpush1.msra.mxu0 %v183
    %218 = vmatprep.subr.mxu0 0.0
    %219 = vmatpush1.msra.mxu0 %v182
    %220 = vmatprep.subr.mxu0 0.0
    %221 = vmatpush1.msra.mxu0 %v181
    %222 = vmatprep.subr.mxu0 0.0
    %223 = vmatpush1.msra.mxu0 %v180
    %224 = vmatprep.subr.mxu0 0.0
    %225 = vmatpush1.msra.mxu0 %v179
    %226 = vmatprep.subr.mxu0 0.0
    %227 = vmatpush1.msra.mxu0 %v178
    %228 = vmatprep.subr.mxu0 0.0
    %229 = vmatpush1.msra.mxu0 %v177
    %230 = vmatprep.subr.mxu0 0.0
    %231 = vmatpush1.msra.mxu0 %v176
    %232 = vmatprep.subr.mxu0 0.0
    %233 = vmatpush2.msra.mxu0 0.0
    %234 = vmatprep.subr.mxu0 0.0
    %235 = vmatpush2.msra.mxu0 0.0
    %236 = vmatprep.subr.mxu0 0.0
    %237 = vmatpush2.msra.mxu0 0.0
    %238 = vmatprep.subr.mxu0 0.0
    %239 = vmatpush2.msra.mxu0 0.0
    %240 = vmatprep.subr.mxu0 0.0
    %241 = vmatpush2.msra.mxu0 0.0
    %242 = vmatprep.subr.mxu0 0.0
    %243 = vmatpush2.msra.mxu0 0.0
    %244 = vmatprep.subr.mxu0 0.0
    %245 = vmatpush2.msra.mxu0 0.0
    %246 = vmatprep.subr.mxu0 0.0
    %247 = vmatpush2.msra.mxu0 0.0
    %248 = vmatprep.subr.mxu0 0.0
    %249 = vmatpush2.msra.mxu0 0.0
    %250 = vmatprep.subr.mxu0 0.0
    %251 = vmatpush2.msra.mxu0 0.0
    %252 = vmatprep.subr.mxu0 0.0
    %253 = vmatpush2.msra.mxu0 0.0
    %254 = vmatprep.subr.mxu0 0.0
    %255 = vmatpush2.msra.mxu0 0.0
    %256 = vmatprep.subr.mxu0 0.0
    %257 = vmatpush2.msra.mxu0 0.0
    %258 = vmatprep.subr.mxu0 0.0
    %259 = vmatpush2.msra.mxu0 0.0
    %260 = vmatprep.subr.mxu0 0.0
    %261 = vmatpush2.msra.mxu0 0.0
    %262 = vmatprep.subr.mxu0 0.0
    %263 = vmatpush2.msra.mxu0 0.0
    %264 = vmatprep.mubr.f32.mxu0 0.0
    %265 = vmatmul.mubr.f32.gmra.mxu0 %v174
    %v266 = vpop.f32.mrf.mxu0
    %v267 = vadd.f32 %v198, %v266
    %v268 = vpop.f32.mrf.mxu0
    %269 = vdwg.mxu0
    %s270 = scalar_lea.vmem %s3, 1
    %v271 = vld [vmem:[%s270] sm:$0x1]
    %s272 = scalar_lea.vmem %s4, 1
    %v273 = vld [vmem:[%s272] sm:$0x1]
    %vm274 = vcmp.lt.s32.totalorder %v43, 24
    %v275 = vsel %vm274, %v267, 0.0
    %276 = vadd.xlane.f32.xlu0 %v275
    %v277 = vpop.xlane.xlu0 %276
    %v278 = vmul.f32 %v277, 0.041666668
    %v279 = vsub.f32 %v267, %v278
    %v280 = vsel %vm274, %v279, 0.0
    %v281 = vmul.f32 %v280, %v280
    %282 = vadd.xlane.f32.xlu0 %v281
    %v283 = vpop.xlane.xlu0 %282
    %v284 = vmul.f32 %v283, 0.041666668
    %v285 = vadd.f32 %v284, 1e-05
    %v286 = vrsqrt.pop %v285
    %v287 = vmul.f32 %v279, %v286
    %v289 = vlaneseq
    %v290 = vshrl.u32 %v289, 7
    %v291 = vsub.s32 0, %v290
    %v292 = vrot.slane %v271, %v291
    %v294 = vmul.f32 %v287, %v292
    %v296 = vlaneseq
    %v297 = vshrl.u32 %v296, 7
    %v298 = vsub.s32 0, %v297
    %v299 = vrot.slane %v273, %v298
    %v301 = vadd.f32 %v294, %v299
    %v302 = vsel %vm274, %v301, 0.0
    %v303 = vxor.u32 %v302, 2147483648
    %v304 = vmul.f32 %v303, 1.442695
    %v305 = vpow.pop %v304
    %v306 = vadd.f32 %v305, 1.0
    %v307 = vrcp.pop %v306
    %v308 = vmul.f32 1.0, %v307
    %v309 = vmul.f32 %v302, %v308
    %s310 = scalar_lea.vmem [#allocation2], 256
    %v311 = vld [vmem:[%s310] sm:$0xff]
    %v312 = vld [vmem:[%s310 + $0x8] sm:$0xff]
    %v313 = vld [vmem:[%s310 + $0x10] sm:$0xff]
    %v314 = vld [vmem:[%s310 + $0x18] sm:$0xff]
    %v315 = vld [vmem:[%s310 + $0x20] sm:$0xff]
    %v316 = vld [vmem:[%s310 + $0x28] sm:$0xff]
    %v317 = vld [vmem:[%s310 + $0x30] sm:$0xff]
    %v318 = vld [vmem:[%s310 + $0x38] sm:$0xff]
    %v319 = vld [vmem:[%s310 + $0x40] sm:$0xff]
    %v320 = vld [vmem:[%s310 + $0x48] sm:$0xff]
    %v321 = vld [vmem:[%s310 + $0x50] sm:$0xff]
    %v322 = vld [vmem:[%s310 + $0x58] sm:$0xff]
    %v323 = vld [vmem:[%s310 + $0x60] sm:$0xff]
    %v324 = vld [vmem:[%s310 + $0x68] sm:$0xff]
    %v325 = vld [vmem:[%s310 + $0x70] sm:$0xff]
    %v326 = vld [vmem:[%s310 + $0x78] sm:$0xff]
    %s327 = scalar_lea.vmem %s2, 2
    %v328 = vld [vmem:[%s327] sm:$0x1]
    %v330 = vlaneseq
    %v331 = vshrl.u32 %v330, 7
    %v332 = vsub.s32 0, %v331
    %v333 = vrot.slane %v328, %v332
    %335 = vmatprep.subr.mxu0 0.0
    %336 = vmatpush1.msra.mxu0 %v326
    %337 = vmatprep.subr.mxu0 0.0
    %338 = vmatpush1.msra.mxu0 %v325
    %339 = vmatprep.subr.mxu0 0.0
    %340 = vmatpush1.msra.mxu0 %v324
    %341 = vmatprep.subr.mxu0 0.0
    %342 = vmatpush1.msra.mxu0 %v323
    %343 = vmatprep.subr.mxu0 0.0
    %344 = vmatpush1.msra.mxu0 %v322
    %345 = vmatprep.subr.mxu0 0.0
    %346 = vmatpush1.msra.mxu0 %v321
    %347 = vmatprep.subr.mxu0 0.0
    %348 = vmatpush1.msra.mxu0 %v320
    %349 = vmatprep.subr.mxu0 0.0
    %350 = vmatpush1.msra.mxu0 %v319
    %351 = vmatprep.subr.mxu0 0.0
    %352 = vmatpush1.msra.mxu0 %v318
    %353 = vmatprep.subr.mxu0 0.0
    %354 = vmatpush1.msra.mxu0 %v317
    %355 = vmatprep.subr.mxu0 0.0
    %356 = vmatpush1.msra.mxu0 %v316
    %357 = vmatprep.subr.mxu0 0.0
    %358 = vmatpush1.msra.mxu0 %v315
    %359 = vmatprep.subr.mxu0 0.0
    %360 = vmatpush1.msra.mxu0 %v314
    %361 = vmatprep.subr.mxu0 0.0
    %362 = vmatpush1.msra.mxu0 %v313
    %363 = vmatprep.subr.mxu0 0.0
    %364 = vmatpush1.msra.mxu0 %v312
    %365 = vmatprep.subr.mxu0 0.0
    %366 = vmatpush1.msra.mxu0 %v311
    %367 = vmatprep.subr.mxu0 0.0
    %368 = vmatpush2.msra.mxu0 0.0
    %369 = vmatprep.subr.mxu0 0.0
    %370 = vmatpush2.msra.mxu0 0.0
    %371 = vmatprep.subr.mxu0 0.0
    %372 = vmatpush2.msra.mxu0 0.0
    %373 = vmatprep.subr.mxu0 0.0
    %374 = vmatpush2.msra.mxu0 0.0
    %375 = vmatprep.subr.mxu0 0.0
    %376 = vmatpush2.msra.mxu0 0.0
    %377 = vmatprep.subr.mxu0 0.0
    %378 = vmatpush2.msra.mxu0 0.0
    %379 = vmatprep.subr.mxu0 0.0
    %380 = vmatpush2.msra.mxu0 0.0
    %381 = vmatprep.subr.mxu0 0.0
    %382 = vmatpush2.msra.mxu0 0.0
    %383 = vmatprep.subr.mxu0 0.0
    %384 = vmatpush2.msra.mxu0 0.0
    %385 = vmatprep.subr.mxu0 0.0
    %386 = vmatpush2.msra.mxu0 0.0
    %387 = vmatprep.subr.mxu0 0.0
    %388 = vmatpush2.msra.mxu0 0.0
    %389 = vmatprep.subr.mxu0 0.0
    %390 = vmatpush2.msra.mxu0 0.0
    %391 = vmatprep.subr.mxu0 0.0
    %392 = vmatpush2.msra.mxu0 0.0
    %393 = vmatprep.subr.mxu0 0.0
    %394 = vmatpush2.msra.mxu0 0.0
    %395 = vmatprep.subr.mxu0 0.0
    %396 = vmatpush2.msra.mxu0 0.0
    %397 = vmatprep.subr.mxu0 0.0
    %398 = vmatpush2.msra.mxu0 0.0
    %399 = vmatprep.mubr.f32.mxu0 0.0
    %400 = vmatmul.mubr.f32.gmra.mxu0 %v309
    %v401 = vpop.f32.mrf.mxu0
    %v402 = vadd.f32 %v333, %v401
    %v403 = vpop.f32.mrf.mxu0
    %404 = vdwg.mxu0
    %s405 = scalar_lea.vmem %s3, 2
    %v406 = vld [vmem:[%s405] sm:$0x1]
    %s407 = scalar_lea.vmem %s4, 2
    %v408 = vld [vmem:[%s407] sm:$0x1]
    %vm409 = vcmp.lt.s32.totalorder %v43, 16
    %v410 = vsel %vm409, %v402, 0.0
    %411 = vadd.xlane.f32.xlu0 %v410
    %v412 = vpop.xlane.xlu0 %411
    %v413 = vmul.f32 %v412, 0.0625
    %v414 = vsub.f32 %v402, %v413
    %v415 = vsel %vm409, %v414, 0.0
    %v416 = vmul.f32 %v415, %v415
    %417 = vadd.xlane.f32.xlu0 %v416
    %v418 = vpop.xlane.xlu0 %417
    %v419 = vmul.f32 %v418, 0.0625
    %v420 = vadd.f32 %v419, 1e-05
    %v421 = vrsqrt.pop %v420
    %v422 = vmul.f32 %v414, %v421
    %v424 = vlaneseq
    %v425 = vshrl.u32 %v424, 7
    %v426 = vsub.s32 0, %v425
    %v427 = vrot.slane %v406, %v426
    %v429 = vmul.f32 %v422, %v427
    %v431 = vlaneseq
    %v432 = vshrl.u32 %v431, 7
    %v433 = vsub.s32 0, %v432
    %v434 = vrot.slane %v408, %v433
    %v436 = vadd.f32 %v429, %v434
    %v437 = vsel %vm409, %v436, 0.0
    %v438 = vxor.u32 %v437, 2147483648
    %v439 = vmul.f32 %v438, 1.442695
    %v440 = vpow.pop %v439
    %v441 = vadd.f32 %v440, 1.0
    %v442 = vrcp.pop %v441
    %v443 = vmul.f32 1.0, %v442
    %v444 = vmul.f32 %v437, %v443
    %s445 = scalar_lea.vmem [#allocation2], 384
    %v446 = vld [vmem:[%s445] sm:$0xff]
    %v447 = vld [vmem:[%s445 + $0x8] sm:$0xff]
    %v448 = vld [vmem:[%s445 + $0x10] sm:$0xff]
    %v449 = vld [vmem:[%s445 + $0x18] sm:$0xff]
    %v450 = vld [vmem:[%s445 + $0x20] sm:$0xff]
    %v451 = vld [vmem:[%s445 + $0x28] sm:$0xff]
    %v452 = vld [vmem:[%s445 + $0x30] sm:$0xff]
    %v453 = vld [vmem:[%s445 + $0x38] sm:$0xff]
    %v454 = vld [vmem:[%s445 + $0x40] sm:$0xff]
    %v455 = vld [vmem:[%s445 + $0x48] sm:$0xff]
    %v456 = vld [vmem:[%s445 + $0x50] sm:$0xff]
    %v457 = vld [vmem:[%s445 + $0x58] sm:$0xff]
    %v458 = vld [vmem:[%s445 + $0x60] sm:$0xff]
    %v459 = vld [vmem:[%s445 + $0x68] sm:$0xff]
    %v460 = vld [vmem:[%s445 + $0x70] sm:$0xff]
    %v461 = vld [vmem:[%s445 + $0x78] sm:$0xff]
    %s462 = scalar_lea.vmem %s2, 3
    %v463 = vld [vmem:[%s462] sm:$0x1]
    %v465 = vlaneseq
    %v466 = vshrl.u32 %v465, 7
    %v467 = vsub.s32 0, %v466
    %v468 = vrot.slane %v463, %v467
    %470 = vmatprep.subr.mxu0 0.0
    %471 = vmatpush1.msra.mxu0 %v461
    %472 = vmatprep.subr.mxu0 0.0
    %473 = vmatpush1.msra.mxu0 %v460
    %474 = vmatprep.subr.mxu0 0.0
    %475 = vmatpush1.msra.mxu0 %v459
    %476 = vmatprep.subr.mxu0 0.0
    %477 = vmatpush1.msra.mxu0 %v458
    %478 = vmatprep.subr.mxu0 0.0
    %479 = vmatpush1.msra.mxu0 %v457
    %480 = vmatprep.subr.mxu0 0.0
    %481 = vmatpush1.msra.mxu0 %v456
    %482 = vmatprep.subr.mxu0 0.0
    %483 = vmatpush1.msra.mxu0 %v455
    %484 = vmatprep.subr.mxu0 0.0
    %485 = vmatpush1.msra.mxu0 %v454
    %486 = vmatprep.subr.mxu0 0.0
    %487 = vmatpush1.msra.mxu0 %v453
    %488 = vmatprep.subr.mxu0 0.0
    %489 = vmatpush1.msra.mxu0 %v452
    %490 = vmatprep.subr.mxu0 0.0
    %491 = vmatpush1.msra.mxu0 %v451
    %492 = vmatprep.subr.mxu0 0.0
    %493 = vmatpush1.msra.mxu0 %v450
    %494 = vmatprep.subr.mxu0 0.0
    %495 = vmatpush1.msra.mxu0 %v449
    %496 = vmatprep.subr.mxu0 0.0
    %497 = vmatpush1.msra.mxu0 %v448
    %498 = vmatprep.subr.mxu0 0.0
    %499 = vmatpush1.msra.mxu0 %v447
    %500 = vmatprep.subr.mxu0 0.0
    %501 = vmatpush1.msra.mxu0 %v446
    %502 = vmatprep.subr.mxu0 0.0
    %503 = vmatpush2.msra.mxu0 0.0
    %504 = vmatprep.subr.mxu0 0.0
    %505 = vmatpush2.msra.mxu0 0.0
    %506 = vmatprep.subr.mxu0 0.0
    %507 = vmatpush2.msra.mxu0 0.0
    %508 = vmatprep.subr.mxu0 0.0
    %509 = vmatpush2.msra.mxu0 0.0
    %510 = vmatprep.subr.mxu0 0.0
    %511 = vmatpush2.msra.mxu0 0.0
    %512 = vmatprep.subr.mxu0 0.0
    %513 = vmatpush2.msra.mxu0 0.0
    %514 = vmatprep.subr.mxu0 0.0
    %515 = vmatpush2.msra.mxu0 0.0
    %516 = vmatprep.subr.mxu0 0.0
    %517 = vmatpush2.msra.mxu0 0.0
    %518 = vmatprep.subr.mxu0 0.0
    %519 = vmatpush2.msra.mxu0 0.0
    %520 = vmatprep.subr.mxu0 0.0
    %521 = vmatpush2.msra.mxu0 0.0
    %522 = vmatprep.subr.mxu0 0.0
    %523 = vmatpush2.msra.mxu0 0.0
    %524 = vmatprep.subr.mxu0 0.0
    %525 = vmatpush2.msra.mxu0 0.0
    %526 = vmatprep.subr.mxu0 0.0
    %527 = vmatpush2.msra.mxu0 0.0
    %528 = vmatprep.subr.mxu0 0.0
    %529 = vmatpush2.msra.mxu0 0.0
    %530 = vmatprep.subr.mxu0 0.0
    %531 = vmatpush2.msra.mxu0 0.0
    %532 = vmatprep.subr.mxu0 0.0
    %533 = vmatpush2.msra.mxu0 0.0
    %534 = vmatprep.mubr.f32.mxu0 0.0
    %535 = vmatmul.mubr.f32.gmra.mxu0 %v444
    %v536 = vpop.f32.mrf.mxu0
    %v537 = vadd.f32 %v468, %v536
    %v538 = vpop.f32.mrf.mxu0
    %539 = vdwg.mxu0
    %s540 = scalar_lea.vmem %s3, 3
    %v541 = vld [vmem:[%s540] sm:$0x1]
    %s542 = scalar_lea.vmem %s4, 3
    %v543 = vld [vmem:[%s542] sm:$0x1]
    %v544 = vsel %vm274, %v537, 0.0
    %545 = vadd.xlane.f32.xlu0 %v544
    %v546 = vpop.xlane.xlu0 %545
    %v547 = vmul.f32 %v546, 0.041666668
    %v548 = vsub.f32 %v537, %v547
    %v549 = vsel %vm274, %v548, 0.0
    %v550 = vmul.f32 %v549, %v549
    %551 = vadd.xlane.f32.xlu0 %v550
    %v552 = vpop.xlane.xlu0 %551
    %v553 = vmul.f32 %v552, 0.041666668
    %v554 = vadd.f32 %v553, 1e-05
    %v555 = vrsqrt.pop %v554
    %v556 = vmul.f32 %v548, %v555
    %v558 = vlaneseq
    %v559 = vshrl.u32 %v558, 7
    %v560 = vsub.s32 0, %v559
    %v561 = vrot.slane %v541, %v560
    %v563 = vmul.f32 %v556, %v561
    %v565 = vlaneseq
    %v566 = vshrl.u32 %v565, 7
    %v567 = vsub.s32 0, %v566
    %v568 = vrot.slane %v543, %v567
    %v570 = vadd.f32 %v563, %v568
    %v571 = vsel %vm274, %v570, 0.0
    %v572 = vxor.u32 %v571, 2147483648
    %v573 = vmul.f32 %v572, 1.442695
    %v574 = vpow.pop %v573
    %v575 = vadd.f32 %v574, 1.0
    %v576 = vrcp.pop %v575
    %v577 = vmul.f32 1.0, %v576
    %v578 = vmul.f32 %v571, %v577
    %v579 = vadd.f32 %v578, %v309
    %s580 = scalar_lea.vmem %s5, 1
    %v581 = vld [vmem:[%s580] sm:$0x1]
    %s582 = scalar_lea.vmem %s6, 1
    %v583 = vld [vmem:[%s582] sm:$0x1]
    %v584 = vsel %vm274, %v579, 0.0
    %585 = vadd.xlane.f32.xlu0 %v584
    %v586 = vpop.xlane.xlu0 %585
    %v587 = vmul.f32 %v586, 0.041666668
    %v588 = vsub.f32 %v579, %v587
    %v589 = vsel %vm274, %v588, 0.0
    %v590 = vmul.f32 %v589, %v589
    %591 = vadd.xlane.f32.xlu0 %v590
    %v592 = vpop.xlane.xlu0 %591
    %v593 = vmul.f32 %v592, 0.041666668
    %v594 = vadd.f32 %v593, 1e-05
    %v595 = vrsqrt.pop %v594
    %v596 = vmul.f32 %v588, %v595
    %v598 = vlaneseq
    %v599 = vshrl.u32 %v598, 7
    %v600 = vsub.s32 0, %v599
    %v601 = vrot.slane %v581, %v600
    %v603 = vmul.f32 %v596, %v601
    %v605 = vlaneseq
    %v606 = vshrl.u32 %v605, 7
    %v607 = vsub.s32 0, %v606
    %v608 = vrot.slane %v583, %v607
    %v610 = vadd.f32 %v603, %v608
    %v611 = vsel %vm274, %v610, 0.0
    %s612 = scalar_lea.vmem [#allocation2], 512
    %v613 = vld [vmem:[%s612] sm:$0xff]
    %v614 = vld [vmem:[%s612 + $0x8] sm:$0xff]
    %v615 = vld [vmem:[%s612 + $0x10] sm:$0xff]
    %v616 = vld [vmem:[%s612 + $0x18] sm:$0xff]
    %v617 = vld [vmem:[%s612 + $0x20] sm:$0xff]
    %v618 = vld [vmem:[%s612 + $0x28] sm:$0xff]
    %v619 = vld [vmem:[%s612 + $0x30] sm:$0xff]
    %v620 = vld [vmem:[%s612 + $0x38] sm:$0xff]
    %v621 = vld [vmem:[%s612 + $0x40] sm:$0xff]
    %v622 = vld [vmem:[%s612 + $0x48] sm:$0xff]
    %v623 = vld [vmem:[%s612 + $0x50] sm:$0xff]
    %v624 = vld [vmem:[%s612 + $0x58] sm:$0xff]
    %v625 = vld [vmem:[%s612 + $0x60] sm:$0xff]
    %v626 = vld [vmem:[%s612 + $0x68] sm:$0xff]
    %v627 = vld [vmem:[%s612 + $0x70] sm:$0xff]
    %v628 = vld [vmem:[%s612 + $0x78] sm:$0xff]
    %s629 = scalar_lea.vmem %s2, 4
    %v630 = vld [vmem:[%s629] sm:$0x1]
    %v632 = vlaneseq
    %v633 = vshrl.u32 %v632, 7
    %v634 = vsub.s32 0, %v633
    %v635 = vrot.slane %v630, %v634
    %637 = vmatprep.subr.mxu0 0.0
    %638 = vmatpush1.msra.mxu0 %v628
    %639 = vmatprep.subr.mxu0 0.0
    %640 = vmatpush1.msra.mxu0 %v627
    %641 = vmatprep.subr.mxu0 0.0
    %642 = vmatpush1.msra.mxu0 %v626
    %643 = vmatprep.subr.mxu0 0.0
    %644 = vmatpush1.msra.mxu0 %v625
    %645 = vmatprep.subr.mxu0 0.0
    %646 = vmatpush1.msra.mxu0 %v624
    %647 = vmatprep.subr.mxu0 0.0
    %648 = vmatpush1.msra.mxu0 %v623
    %649 = vmatprep.subr.mxu0 0.0
    %650 = vmatpush1.msra.mxu0 %v622
    %651 = vmatprep.subr.mxu0 0.0
    %652 = vmatpush1.msra.mxu0 %v621
    %653 = vmatprep.subr.mxu0 0.0
    %654 = vmatpush1.msra.mxu0 %v620
    %655 = vmatprep.subr.mxu0 0.0
    %656 = vmatpush1.msra.mxu0 %v619
    %657 = vmatprep.subr.mxu0 0.0
    %658 = vmatpush1.msra.mxu0 %v618
    %659 = vmatprep.subr.mxu0 0.0
    %660 = vmatpush1.msra.mxu0 %v617
    %661 = vmatprep.subr.mxu0 0.0
    %662 = vmatpush1.msra.mxu0 %v616
    %663 = vmatprep.subr.mxu0 0.0
    %664 = vmatpush1.msra.mxu0 %v615
    %665 = vmatprep.subr.mxu0 0.0
    %666 = vmatpush1.msra.mxu0 %v614
    %667 = vmatprep.subr.mxu0 0.0
    %668 = vmatpush1.msra.mxu0 %v613
    %669 = vmatprep.subr.mxu0 0.0
    %670 = vmatpush2.msra.mxu0 0.0
    %671 = vmatprep.subr.mxu0 0.0
    %672 = vmatpush2.msra.mxu0 0.0
    %673 = vmatprep.subr.mxu0 0.0
    %674 = vmatpush2.msra.mxu0 0.0
    %675 = vmatprep.subr.mxu0 0.0
    %676 = vmatpush2.msra.mxu0 0.0
    %677 = vmatprep.subr.mxu0 0.0
    %678 = vmatpush2.msra.mxu0 0.0
    %679 = vmatprep.subr.mxu0 0.0
    %680 = vmatpush2.msra.mxu0 0.0
    %681 = vmatprep.subr.mxu0 0.0
    %682 = vmatpush2.msra.mxu0 0.0
    %683 = vmatprep.subr.mxu0 0.0
    %684 = vmatpush2.msra.mxu0 0.0
    %685 = vmatprep.subr.mxu0 0.0
    %686 = vmatpush2.msra.mxu0 0.0
    %687 = vmatprep.subr.mxu0 0.0
    %688 = vmatpush2.msra.mxu0 0.0
    %689 = vmatprep.subr.mxu0 0.0
    %690 = vmatpush2.msra.mxu0 0.0
    %691 = vmatprep.subr.mxu0 0.0
    %692 = vmatpush2.msra.mxu0 0.0
    %693 = vmatprep.subr.mxu0 0.0
    %694 = vmatpush2.msra.mxu0 0.0
    %695 = vmatprep.subr.mxu0 0.0
    %696 = vmatpush2.msra.mxu0 0.0
    %697 = vmatprep.subr.mxu0 0.0
    %698 = vmatpush2.msra.mxu0 0.0
    %699 = vmatprep.subr.mxu0 0.0
    %700 = vmatpush2.msra.mxu0 0.0
    %701 = vmatprep.mubr.f32.mxu0 0.0
    %702 = vmatmul.mubr.f32.gmra.mxu0 %v611
    %v703 = vpop.f32.mrf.mxu0
    %v704 = vadd.f32 %v635, %v703
    %v705 = vpop.f32.mrf.mxu0
    %706 = vdwg.mxu0
    %s707 = scalar_lea.vmem %s3, 4
    %v708 = vld [vmem:[%s707] sm:$0x1]
    %s709 = scalar_lea.vmem %s4, 4
    %v710 = vld [vmem:[%s709] sm:$0x1]
    %v711 = vsel %vm139, %v704, 0.0
    %712 = vadd.xlane.f32.xlu0 %v711
    %v713 = vpop.xlane.xlu0 %712
    %v714 = vmul.f32 %v713, 0.03125
    %v715 = vsub.f32 %v704, %v714
    %v716 = vsel %vm139, %v715, 0.0
    %v717 = vmul.f32 %v716, %v716
    %718 = vadd.xlane.f32.xlu0 %v717
    %v719 = vpop.xlane.xlu0 %718
    %v720 = vmul.f32 %v719, 0.03125
    %v721 = vadd.f32 %v720, 1e-05
    %v722 = vrsqrt.pop %v721
    %v723 = vmul.f32 %v715, %v722
    %v725 = vlaneseq
    %v726 = vshrl.u32 %v725, 7
    %v727 = vsub.s32 0, %v726
    %v728 = vrot.slane %v708, %v727
    %v730 = vmul.f32 %v723, %v728
    %v732 = vlaneseq
    %v733 = vshrl.u32 %v732, 7
    %v734 = vsub.s32 0, %v733
    %v735 = vrot.slane %v710, %v734
    %v737 = vadd.f32 %v730, %v735
    %v738 = vsel %vm139, %v737, 0.0
    %v739 = vxor.u32 %v738, 2147483648
    %v740 = vmul.f32 %v739, 1.442695
    %v741 = vpow.pop %v740
    %v742 = vadd.f32 %v741, 1.0
    %v743 = vrcp.pop %v742
    %v744 = vmul.f32 1.0, %v743
    %v745 = vmul.f32 %v738, %v744
    %v746 = vadd.f32 %v745, %v174
    %v747 = vld [vmem:[%s5] sm:$0x1]
    %v748 = vld [vmem:[%s6] sm:$0x1]
    %v749 = vsel %vm139, %v746, 0.0
    %750 = vadd.xlane.f32.xlu0 %v749
    %v751 = vpop.xlane.xlu0 %750
    %v752 = vmul.f32 %v751, 0.03125
    %v753 = vsub.f32 %v746, %v752
    %v754 = vsel %vm139, %v753, 0.0
    %v755 = vmul.f32 %v754, %v754
    %756 = vadd.xlane.f32.xlu0 %v755
    %v757 = vpop.xlane.xlu0 %756
    %v758 = vmul.f32 %v757, 0.03125
    %v759 = vadd.f32 %v758, 1e-05
    %v760 = vrsqrt.pop %v759
    %v761 = vmul.f32 %v753, %v760
    %v763 = vlaneseq
    %v764 = vshrl.u32 %v763, 7
    %v765 = vsub.s32 0, %v764
    %v766 = vrot.slane %v747, %v765
    %v768 = vmul.f32 %v761, %v766
    %v770 = vlaneseq
    %v771 = vshrl.u32 %v770, 7
    %v772 = vsub.s32 0, %v771
    %v773 = vrot.slane %v748, %v772
    %v775 = vadd.f32 %v768, %v773
    %v776 = vsel %vm139, %v775, 0.0
    %777 = vst [vmem:[#allocation5] sm:$0xff] %v776
    // Predicated region
    $region34: #{synapse_unet_forward.1} parent=1 // pred_check
      _
    $region35: #{synapse_unet_forward.1} parent=1 // pred_check_branch
      %779 = sbr.rel (0) target = $region37
    $region36: #{synapse_unet_forward.1} parent=1 // pred_region
      %s781 = ssub.s32 128, 128
      %782 = vsyncadd [#allocation4], %s781
      %s784 = sshll.u32 [#allocation5], 4
      %s785 = int_to_ptr.vmem [resolvable:$true] %s784
      %787 = dma.vmem_to_hbm [thread:$0]  %s785, 128, %s7, [#allocation4]
    $region37: #{synapse_unet_forward.1} parent=1 // pred_fallthru
      _
    // Predicated region
    $region38: #{synapse_unet_forward.1} parent=1 // pred_check
      _
    $region39: #{synapse_unet_forward.1} parent=1 // pred_check_branch
      %789 = sbr.rel (0) target = $region41
    $region40: #{synapse_unet_forward.1} parent=1 // pred_region
      %790 = dma.done [#allocation4], 128
    $region41: #{synapse_unet_forward.1} parent=1 // pred_fallthru
      _
    %791 = vsyncpa [#allocation3], 1
    %792 = vsyncpa [#allocation4], 1

</llo_original>
